<compile_context>
chip_gen: v7x
topology: tpu7x:2x2x1
jax: 0.10.0
libtpu: 0.0.40
codegen_flags: <defaults>
</compile_context>

<pallas_src>
import jax
import jax.numpy as jnp
from jax.experimental import pallas as pl
from jax.experimental.pallas import tpu as pltpu


def waveout_kernel(x_ref, w1_ref, b1_ref, w2_ref, b2_ref, o_ref):
    # x_ref : (TILE_N, C, S_TILE, 128)  VMEM activations (sublane=S_TILE, lane=128)
    # w1_ref: (C, C)  SMEM  first.weight  (C_out, C_in), k=1 squeezed
    # b1_ref: (C,)    SMEM  first.bias
    # w2_ref: (1, C)  SMEM  second.weight (1, C_in), k=1 squeezed
    # b2_ref: (1,)    SMEM  second.bias
    # o_ref : (TILE_N, 1, S_TILE, 128)  VMEM output tile
    C = x_ref.shape[1]
    x = x_ref[...]                                           # whole tile, native dtype

    # Per-input-channel slices, upcast to f32 in-vreg (supports bf16 inputs);
    # each slice is a dense (TILE_N, S_TILE, 128) tile -> full vreg occupancy.
    xs = [x[:, c].astype(jnp.float32) for c in range(C)]

    # Second-conv bias seeds the output accumulator.
    y = jnp.full(xs[0].shape, b2_ref[0], dtype=jnp.float32)

    # Both 1x1 convs as fully unrolled VPU broadcast-FMAs (C is static & tiny),
    # fused with ReLU so the hidden activation never leaves registers.
    for o in range(C):
        h = jnp.full(xs[0].shape, b1_ref[o], dtype=jnp.float32)
        for c in range(C):
            h = h + w1_ref[o, c] * xs[c]
        h = jnp.maximum(h, 0.0)                              # ReLU
        y = y + w2_ref[0, o] * h                             # C -> 1 projection

    o_ref[...] = jnp.clip(y, -1.0, 1.0)[:, None].astype(o_ref.dtype)


def waveout_block(x_ncl, w1, b1, w2, b2, *, max_s_tile=2048):
    """x_ncl: (N, C, L); w1: (C, C[,1]); b1: (C,); w2: (1, C[,1]); b2: (1,) -> (N, 1, L)."""
    N, C, L = x_ncl.shape
    out_dtype = x_ncl.dtype

    # Fold L onto (sublane, lane) as (S, 128).  Free (contiguous) reshape when
    # L is a multiple of 128; otherwise pad once with zeros (ragged tail).
    S = pl.cdiv(L, 128)
    L_pad = S * 128
    if L_pad != L:
        x_ncl = jnp.pad(x_ncl, ((0, 0), (0, 0), (0, L_pad - L)))
    x4 = x_ncl.reshape(N, C, S, 128)

    # --- tile sizing --------------------------------------------------------
    # Per-step HBM traffic ~= TILE_N*(C+1)*S_TILE*128*itemsize.  Default
    # max_s_tile=2048 -> ~5 MB/step at C=4 f32: enough to amortize the fixed
    # ~0.35 us step cost on every generation while fitting v7x's 64 MiB VMEM.
    # (Raise toward ~4096 on v5e/v6e for a little more roofline headroom.)
    if S > max_s_tile:
        s_tile = max(8, (max_s_tile // 8) * 8)   # sublane-aligned partial tile
    else:
        s_tile = S                               # full extent (always legal)
    num_s_tiles = pl.cdiv(S, s_tile)

    # Short-L / large-N: fold batch elements into the block so each grid step
    # still moves MBs instead of KBs.
    n_tile = min(N, max(1, max_s_tile // max(s_tile, 1)))
    if N > 1 and pl.cdiv(N, n_tile) * num_s_tiles < 2:
        n_tile = pl.cdiv(N, 2)                   # keep >=2 steps (megacore / pipelining)
    num_n_tiles = pl.cdiv(N, n_tile)

    # Weights/biases: tiny, f32, resident in SMEM for scalar broadcast-FMAs.
    w1 = w1.astype(jnp.float32).reshape(C, C)
    b1 = b1.astype(jnp.float32).reshape(C)
    w2 = w2.astype(jnp.float32).reshape(1, C)
    b2 = b2.astype(jnp.float32).reshape(1)

    cost = pl.CostEstimate(
        flops=2 * N * L * C * (C + 1),
        transcendentals=0,
        bytes_accessed=N * L * C * jnp.dtype(x4.dtype).itemsize
        + N * L * jnp.dtype(out_dtype).itemsize,
    )

    smem = pl.BlockSpec(memory_space=pltpu.MemorySpace.SMEM)   # resident scalars
    out4 = pl.pallas_call(
        waveout_kernel,
        out_shape=jax.ShapeDtypeStruct((N, 1, S, 128), out_dtype),
        grid=(num_n_tiles, num_s_tiles),
        in_specs=[
            pl.BlockSpec((n_tile, C, s_tile, 128), lambda n, s: (n, 0, s, 0)),
            smem, smem, smem, smem,
        ],
        out_specs=pl.BlockSpec((n_tile, 1, s_tile, 128), lambda n, s: (n, 0, s, 0)),
        compiler_params=pltpu.CompilerParams(
            dimension_semantics=("parallel", "parallel"),
            vmem_limit_bytes=48 * 1024 * 1024,
        ),
        cost_estimate=cost,
    )(x4, w1, b1, w2, b2)

    return out4.reshape(N, 1, L_pad)[:, :, :L]


def waveout_ref(x_ncl, w1, b1, w2, b2):
    """Plain-JAX reference identical to the PyTorch forward."""
    C = x_ncl.shape[1]
    h = jnp.einsum("ncl,oc->nol", x_ncl, w1.reshape(C, C)) + b1.reshape(-1)[None, :, None]
    h = jnp.maximum(h, 0.0)
    y = jnp.einsum("ncl,oc->nol", h, w2.reshape(1, C)) + b2.reshape(-1)[None, :, None]
    return jnp.clip(y, -1.0, 1.0)


if __name__ == "__main__":
    # Small shapes consistent with the module: batch=2, channels=4, length=16.
    N, C, L = 2, 4, 16
    key = jax.random.PRNGKey(0)
    kx, kw1, kb1, kw2, kb2, kx2 = jax.random.split(key, 6)

    x = jax.random.normal(kx, (N, C, L), dtype=jnp.float32)

    # Deterministic parameter init mimicking PyTorch Conv1d default
    # (uniform in [-1/sqrt(fan_in), 1/sqrt(fan_in)], fan_in = C * kernel_size).
    bound = 1.0 / jnp.sqrt(jnp.float32(C))
    w1 = jax.random.uniform(kw1, (C, C), jnp.float32, -bound, bound)   # first.weight (k=1 squeezed)
    b1 = jax.random.uniform(kb1, (C,), jnp.float32, -bound, bound)     # first.bias
    w2 = jax.random.uniform(kw2, (1, C), jnp.float32, -bound, bound)   # second.weight (k=1 squeezed)
    b2 = jax.random.uniform(kb2, (1,), jnp.float32, -bound, bound)     # second.bias

    out = jax.block_until_ready(waveout_block(x, w1, b1, w2, b2))
    ref = waveout_ref(x, w1, b1, w2, b2)
    assert out.shape == (N, 1, L), out.shape
    assert jnp.allclose(out, ref, atol=1e-5, rtol=1e-5), "mismatch vs reference"

    # Multi-tile pipelined path: ragged L (not a multiple of 128), partial last
    # sublane tile, batch > 1, small max_s_tile to force several grid steps.
    x2 = jax.random.normal(kx2, (2, C, 5000), dtype=jnp.float32)
    out2 = jax.block_until_ready(waveout_block(x2, w1, b1, w2, b2, max_s_tile=16))
    ref2 = waveout_ref(x2, w1, b1, w2, b2)
    assert out2.shape == (2, 1, 5000), out2.shape
    assert jnp.allclose(out2, ref2, atol=1e-5, rtol=1e-5), "mismatch vs reference (tiled)"

    print("KERNEL_OK")
</pallas_src>

<mosaic_0001>
module attributes {stable_mosaic.version = 11 : i64} {
  func.func @waveout_kernel(%arg0: i32, %arg1: i32, %arg2: memref<1x4x1x128xf32, #tpu.memory_space<vmem>>, %arg3: memref<4x4xf32, #tpu.memory_space<smem>>, %arg4: memref<4xf32, #tpu.memory_space<smem>>, %arg5: memref<1x4xf32, #tpu.memory_space<smem>>, %arg6: memref<1xf32, #tpu.memory_space<smem>>, %arg7: memref<1x1x1x128xf32, #tpu.memory_space<vmem>>) attributes {dimension_semantics = [#tpu.dimension_semantics<parallel>, #tpu.dimension_semantics<parallel>], iteration_bounds = array<i64: 2, 1>, scalar_prefetch = 0 : i64, scratch_operands = 0 : i64, tpu.core_type = #tpu.core_type<tc>, window_params = [{transform_indices = @transform_0, window_bounds = array<i64: 1, 4, 1, 128>}, {transform_indices = @transform_1, window_bounds = array<i64: 4, 4>}, {transform_indices = @transform_2, window_bounds = array<i64: 4>}, {transform_indices = @transform_3, window_bounds = array<i64: 1, 4>}, {transform_indices = @transform_4, window_bounds = array<i64: 1>}, {transform_indices = @transform_5, window_bounds = array<i64: 1, 1, 1, 128>}]} {
    %c0 = arith.constant 0 : index
    %c0_0 = arith.constant 0 : index
    %c0_1 = arith.constant 0 : index
    %c0_2 = arith.constant 0 : index
    %0 = vector.load %arg2[%c0, %c0_0, %c0_1, %c0_2] : memref<1x4x1x128xf32, #tpu.memory_space<vmem>>, vector<1x4x1x128xf32>
    %1 = vector.extract_strided_slice %0 {offsets = [0, 0, 0, 0], sizes = [1, 1, 1, 128], strides = [1, 1, 1, 1]} : vector<1x4x1x128xf32> to vector<1x1x1x128xf32>
    %2 = vector.shape_cast %1 : vector<1x1x1x128xf32> to vector<1x1x128xf32>
    %3 = vector.extract_strided_slice %0 {offsets = [0, 1, 0, 0], sizes = [1, 1, 1, 128], strides = [1, 1, 1, 1]} : vector<1x4x1x128xf32> to vector<1x1x1x128xf32>
    %4 = vector.shape_cast %3 : vector<1x1x1x128xf32> to vector<1x1x128xf32>
    %5 = vector.extract_strided_slice %0 {offsets = [0, 2, 0, 0], sizes = [1, 1, 1, 128], strides = [1, 1, 1, 1]} : vector<1x4x1x128xf32> to vector<1x1x1x128xf32>
    %6 = vector.shape_cast %5 : vector<1x1x1x128xf32> to vector<1x1x128xf32>
    %7 = vector.extract_strided_slice %0 {offsets = [0, 3, 0, 0], sizes = [1, 1, 1, 128], strides = [1, 1, 1, 1]} : vector<1x4x1x128xf32> to vector<1x1x1x128xf32>
    %8 = vector.shape_cast %7 : vector<1x1x1x128xf32> to vector<1x1x128xf32>
    %c0_3 = arith.constant 0 : index
    %9 = memref.load %arg6[%c0_3] : memref<1xf32, #tpu.memory_space<smem>>
    %10 = vector.broadcast %9 : f32 to vector<1x1x128xf32>
    %c0_4 = arith.constant 0 : index
    %11 = memref.load %arg4[%c0_4] : memref<4xf32, #tpu.memory_space<smem>>
    %12 = vector.broadcast %11 : f32 to vector<1x1x128xf32>
    %c0_5 = arith.constant 0 : index
    %c0_6 = arith.constant 0 : index
    %13 = memref.load %arg3[%c0_5, %c0_6] : memref<4x4xf32, #tpu.memory_space<smem>>
    %14 = vector.broadcast %13 : f32 to vector<1x1x128xf32>
    %15 = arith.mulf %14, %2 : vector<1x1x128xf32>
    %16 = arith.addf %12, %15 : vector<1x1x128xf32>
    %c0_7 = arith.constant 0 : index
    %c1 = arith.constant 1 : index
    %17 = memref.load %arg3[%c0_7, %c1] : memref<4x4xf32, #tpu.memory_space<smem>>
    %18 = vector.broadcast %17 : f32 to vector<1x1x128xf32>
    %19 = arith.mulf %18, %4 : vector<1x1x128xf32>
    %20 = arith.addf %16, %19 : vector<1x1x128xf32>
    %c0_8 = arith.constant 0 : index
    %c2 = arith.constant 2 : index
    %21 = memref.load %arg3[%c0_8, %c2] : memref<4x4xf32, #tpu.memory_space<smem>>
    %22 = vector.broadcast %21 : f32 to vector<1x1x128xf32>
    %23 = arith.mulf %22, %6 : vector<1x1x128xf32>
    %24 = arith.addf %20, %23 : vector<1x1x128xf32>
    %c0_9 = arith.constant 0 : index
    %c3 = arith.constant 3 : index
    %25 = memref.load %arg3[%c0_9, %c3] : memref<4x4xf32, #tpu.memory_space<smem>>
    %26 = vector.broadcast %25 : f32 to vector<1x1x128xf32>
    %27 = arith.mulf %26, %8 : vector<1x1x128xf32>
    %28 = arith.addf %24, %27 : vector<1x1x128xf32>
    %cst = arith.constant 0.000000e+00 : f32
    %29 = vector.broadcast %cst : f32 to vector<1x1x128xf32>
    %30 = arith.maximumf %28, %29 : vector<1x1x128xf32>
    %c0_10 = arith.constant 0 : index
    %c0_11 = arith.constant 0 : index
    %31 = memref.load %arg5[%c0_10, %c0_11] : memref<1x4xf32, #tpu.memory_space<smem>>
    %32 = vector.broadcast %31 : f32 to vector<1x1x128xf32>
    %33 = arith.mulf %32, %30 : vector<1x1x128xf32>
    %34 = arith.addf %10, %33 : vector<1x1x128xf32>
    %c1_12 = arith.constant 1 : index
    %35 = memref.load %arg4[%c1_12] : memref<4xf32, #tpu.memory_space<smem>>
    %36 = vector.broadcast %35 : f32 to vector<1x1x128xf32>
    %c1_13 = arith.constant 1 : index
    %c0_14 = arith.constant 0 : index
    %37 = memref.load %arg3[%c1_13, %c0_14] : memref<4x4xf32, #tpu.memory_space<smem>>
    %38 = vector.broadcast %37 : f32 to vector<1x1x128xf32>
    %39 = arith.mulf %38, %2 : vector<1x1x128xf32>
    %40 = arith.addf %36, %39 : vector<1x1x128xf32>
    %c1_15 = arith.constant 1 : index
    %c1_16 = arith.constant 1 : index
    %41 = memref.load %arg3[%c1_15, %c1_16] : memref<4x4xf32, #tpu.memory_space<smem>>
    %42 = vector.broadcast %41 : f32 to vector<1x1x128xf32>
    %43 = arith.mulf %42, %4 : vector<1x1x128xf32>
    %44 = arith.addf %40, %43 : vector<1x1x128xf32>
    %c1_17 = arith.constant 1 : index
    %c2_18 = arith.constant 2 : index
    %45 = memref.load %arg3[%c1_17, %c2_18] : memref<4x4xf32, #tpu.memory_space<smem>>
    %46 = vector.broadcast %45 : f32 to vector<1x1x128xf32>
    %47 = arith.mulf %46, %6 : vector<1x1x128xf32>
    %48 = arith.addf %44, %47 : vector<1x1x128xf32>
    %c1_19 = arith.constant 1 : index
    %c3_20 = arith.constant 3 : index
    %49 = memref.load %arg3[%c1_19, %c3_20] : memref<4x4xf32, #tpu.memory_space<smem>>
    %50 = vector.broadcast %49 : f32 to vector<1x1x128xf32>
    %51 = arith.mulf %50, %8 : vector<1x1x128xf32>
    %52 = arith.addf %48, %51 : vector<1x1x128xf32>
    %cst_21 = arith.constant 0.000000e+00 : f32
    %53 = vector.broadcast %cst_21 : f32 to vector<1x1x128xf32>
    %54 = arith.maximumf %52, %53 : vector<1x1x128xf32>
    %c0_22 = arith.constant 0 : index
    %c1_23 = arith.constant 1 : index
    %55 = memref.load %arg5[%c0_22, %c1_23] : memref<1x4xf32, #tpu.memory_space<smem>>
    %56 = vector.broadcast %55 : f32 to vector<1x1x128xf32>
    %57 = arith.mulf %56, %54 : vector<1x1x128xf32>
    %58 = arith.addf %34, %57 : vector<1x1x128xf32>
    %c2_24 = arith.constant 2 : index
    %59 = memref.load %arg4[%c2_24] : memref<4xf32, #tpu.memory_space<smem>>
    %60 = vector.broadcast %59 : f32 to vector<1x1x128xf32>
    %c2_25 = arith.constant 2 : index
    %c0_26 = arith.constant 0 : index
    %61 = memref.load %arg3[%c2_25, %c0_26] : memref<4x4xf32, #tpu.memory_space<smem>>
    %62 = vector.broadcast %61 : f32 to vector<1x1x128xf32>
    %63 = arith.mulf %62, %2 : vector<1x1x128xf32>
    %64 = arith.addf %60, %63 : vector<1x1x128xf32>
    %c2_27 = arith.constant 2 : index
    %c1_28 = arith.constant 1 : index
    %65 = memref.load %arg3[%c2_27, %c1_28] : memref<4x4xf32, #tpu.memory_space<smem>>
    %66 = vector.broadcast %65 : f32 to vector<1x1x128xf32>
    %67 = arith.mulf %66, %4 : vector<1x1x128xf32>
    %68 = arith.addf %64, %67 : vector<1x1x128xf32>
    %c2_29 = arith.constant 2 : index
    %c2_30 = arith.constant 2 : index
    %69 = memref.load %arg3[%c2_29, %c2_30] : memref<4x4xf32, #tpu.memory_space<smem>>
    %70 = vector.broadcast %69 : f32 to vector<1x1x128xf32>
    %71 = arith.mulf %70, %6 : vector<1x1x128xf32>
    %72 = arith.addf %68, %71 : vector<1x1x128xf32>
    %c2_31 = arith.constant 2 : index
    %c3_32 = arith.constant 3 : index
    %73 = memref.load %arg3[%c2_31, %c3_32] : memref<4x4xf32, #tpu.memory_space<smem>>
    %74 = vector.broadcast %73 : f32 to vector<1x1x128xf32>
    %75 = arith.mulf %74, %8 : vector<1x1x128xf32>
    %76 = arith.addf %72, %75 : vector<1x1x128xf32>
    %cst_33 = arith.constant 0.000000e+00 : f32
    %77 = vector.broadcast %cst_33 : f32 to vector<1x1x128xf32>
    %78 = arith.maximumf %76, %77 : vector<1x1x128xf32>
    %c0_34 = arith.constant 0 : index
    %c2_35 = arith.constant 2 : index
    %79 = memref.load %arg5[%c0_34, %c2_35] : memref<1x4xf32, #tpu.memory_space<smem>>
    %80 = vector.broadcast %79 : f32 to vector<1x1x128xf32>
    %81 = arith.mulf %80, %78 : vector<1x1x128xf32>
    %82 = arith.addf %58, %81 : vector<1x1x128xf32>
    %c3_36 = arith.constant 3 : index
    %83 = memref.load %arg4[%c3_36] : memref<4xf32, #tpu.memory_space<smem>>
    %84 = vector.broadcast %83 : f32 to vector<1x1x128xf32>
    %c3_37 = arith.constant 3 : index
    %c0_38 = arith.constant 0 : index
    %85 = memref.load %arg3[%c3_37, %c0_38] : memref<4x4xf32, #tpu.memory_space<smem>>
    %86 = vector.broadcast %85 : f32 to vector<1x1x128xf32>
    %87 = arith.mulf %86, %2 : vector<1x1x128xf32>
    %88 = arith.addf %84, %87 : vector<1x1x128xf32>
    %c3_39 = arith.constant 3 : index
    %c1_40 = arith.constant 1 : index
    %89 = memref.load %arg3[%c3_39, %c1_40] : memref<4x4xf32, #tpu.memory_space<smem>>
    %90 = vector.broadcast %89 : f32 to vector<1x1x128xf32>
    %91 = arith.mulf %90, %4 : vector<1x1x128xf32>
    %92 = arith.addf %88, %91 : vector<1x1x128xf32>
    %c3_41 = arith.constant 3 : index
    %c2_42 = arith.constant 2 : index
    %93 = memref.load %arg3[%c3_41, %c2_42] : memref<4x4xf32, #tpu.memory_space<smem>>
    %94 = vector.broadcast %93 : f32 to vector<1x1x128xf32>
    %95 = arith.mulf %94, %6 : vector<1x1x128xf32>
    %96 = arith.addf %92, %95 : vector<1x1x128xf32>
    %c3_43 = arith.constant 3 : index
    %c3_44 = arith.constant 3 : index
    %97 = memref.load %arg3[%c3_43, %c3_44] : memref<4x4xf32, #tpu.memory_space<smem>>
    %98 = vector.broadcast %97 : f32 to vector<1x1x128xf32>
    %99 = arith.mulf %98, %8 : vector<1x1x128xf32>
    %100 = arith.addf %96, %99 : vector<1x1x128xf32>
    %cst_45 = arith.constant 0.000000e+00 : f32
    %101 = vector.broadcast %cst_45 : f32 to vector<1x1x128xf32>
    %102 = arith.maximumf %100, %101 : vector<1x1x128xf32>
    %c0_46 = arith.constant 0 : index
    %c3_47 = arith.constant 3 : index
    %103 = memref.load %arg5[%c0_46, %c3_47] : memref<1x4xf32, #tpu.memory_space<smem>>
    %104 = vector.broadcast %103 : f32 to vector<1x1x128xf32>
    %105 = arith.mulf %104, %102 : vector<1x1x128xf32>
    %106 = arith.addf %82, %105 : vector<1x1x128xf32>
    %cst_48 = arith.constant -1.000000e+00 : f32
    %cst_49 = arith.constant 1.000000e+00 : f32
    %107 = vector.broadcast %cst_48 : f32 to vector<1x1x128xf32>
    %108 = arith.maximumf %107, %106 : vector<1x1x128xf32>
    %109 = vector.broadcast %cst_49 : f32 to vector<1x1x128xf32>
    %110 = arith.minimumf %109, %108 : vector<1x1x128xf32>
    %111 = vector.shape_cast %110 : vector<1x1x128xf32> to vector<1x1x1x128xf32>
    %c0_50 = arith.constant 0 : index
    %c0_51 = arith.constant 0 : index
    %c0_52 = arith.constant 0 : index
    %c0_53 = arith.constant 0 : index
    %112 = vector.load %arg7[%c0_50, %c0_51, %c0_52, %c0_53] : memref<1x1x1x128xf32, #tpu.memory_space<vmem>>, vector<1x1x1x128xf32>
    tpu.vector_store %arg7[%c0_50, %c0_51, %c0_52, %c0_53], %111 {strides = array<i32>} : memref<1x1x1x128xf32, #tpu.memory_space<vmem>>, vector<1x1x1x128xf32>,
    return
  }
  func.func @transform_0(%arg0: i32, %arg1: i32) -> (i32, i32, i32, i32) {
    %c0_i32 = arith.constant 0 : i32
    %c0_i32_0 = arith.constant 0 : i32
    %c0_i32_1 = arith.constant 0 : i32
    return %arg0, %c0_i32, %arg1, %c0_i32_0 : i32, i32, i32, i32
  }
  func.func @transform_1(%arg0: i32, %arg1: i32) -> (i32, i32) {
    %c0_i32 = arith.constant 0 : i32
    %c0_i32_0 = arith.constant 0 : i32
    %c0_i32_1 = arith.constant 0 : i32
    return %c0_i32, %c0_i32_0 : i32, i32
  }
  func.func @transform_2(%arg0: i32, %arg1: i32) -> i32 {
    %c0_i32 = arith.constant 0 : i32
    %c0_i32_0 = arith.constant 0 : i32
    return %c0_i32 : i32
  }
  func.func @transform_3(%arg0: i32, %arg1: i32) -> (i32, i32) {
    %c0_i32 = arith.constant 0 : i32
    %c0_i32_0 = arith.constant 0 : i32
    %c0_i32_1 = arith.constant 0 : i32
    return %c0_i32, %c0_i32_0 : i32, i32
  }
  func.func @transform_4(%arg0: i32, %arg1: i32) -> i32 {
    %c0_i32 = arith.constant 0 : i32
    %c0_i32_0 = arith.constant 0 : i32
    return %c0_i32 : i32
  }
  func.func @transform_5(%arg0: i32, %arg1: i32) -> (i32, i32, i32, i32) {
    %c0_i32 = arith.constant 0 : i32
    %c0_i32_0 = arith.constant 0 : i32
    %c0_i32_1 = arith.constant 0 : i32
    return %arg0, %c0_i32, %arg1, %c0_i32_0 : i32, i32, i32, i32
  }
}

</mosaic_0001>

<llo_original>
// kernel: tpu_custom_call.1
$region0: #{tpu_custom_call.1}
  #allocation0 [shape = 'u32[]', space=smem, size = 0x4, offset = 0x4, fixed_abs, tag = 'smem constant byte address 0x4 - core index']
  #allocation1 [shape = 'u32[144,128]{1,0:T(1,128)}', space=vmem, size = 0x12000, scoped, tag = 'internal scratch']
  #allocation2 [shape = 'f32[1]{0:T(128)S(6)}', space=smem, size = 0x200, scoped, tag = 'scoped memory for tpu_custom_call.1']
  %s0 = inlined_call_operand.hbm [shape: f32[2,4,1,128], index: 0, kind: input, shape index: {}]
  %s1 = inlined_call_operand.vmem [shape: f32[4,4], index: 1, kind: input, shape index: {}]
  %s2 = inlined_call_operand.vmem [shape: f32[4], index: 2, kind: input, shape index: {}]
  %s3 = inlined_call_operand.vmem [shape: f32[1,4], index: 3, kind: input, shape index: {}]
  %s4 = inlined_call_operand.<no memory space> [shape: f32[1], index: 4, kind: input, shape index: {}]
  %s5 = inlined_call_operand.hbm [shape: f32[2,1,1,128], index: 5, kind: output, shape index: {}]
  %s6 = sld [smem:[#allocation0]]
  $region69: #{tpu_custom_call.1} parent=0
    _
  %s8 = ssub.s32 1, %s6
  %s9 = scalar_select 0, %s8, %s6
  %10 = sst [smem:[#allocation2]] %s4
  $region1: #{tpu_custom_call.1} parent=0
    #allocation3 [shape = 'u8[4096]{0}', space=vmem, size = 0x1000, scoped, tag = 'input window, operand 0']
    #allocation4 [shape = 's32[2]{0}', space=sflag, size = 0x8, scoped, tag = 'scoped memory for tpu_custom_call.1']
    #allocation5 [shape = 's32[2]{0}', space=sflag, size = 0x8, scoped, tag = 'scoped memory for tpu_custom_call.1']
    #allocation6 [shape = 's32[2]{0}', space=sflag, size = 0x8, scoped, tag = 'scoped memory for tpu_custom_call.1']
    #allocation7 [shape = 'u8[2048]{0}', space=smem, size = 0x800, scoped, tag = 'input window, operand 1, single buffered']
    #allocation8 [shape = 'u8[512]{0}', space=smem, size = 0x200, scoped, tag = 'input window, operand 2, single buffered']
    #allocation9 [shape = 's32[1]{0}', space=sflag, size = 0x4, scoped, tag = 'scoped memory for tpu_custom_call.1']
    #allocation10 [shape = 'u8[512]{0}', space=smem, size = 0x200, scoped, tag = 'input window, operand 3, single buffered']
    #allocation11 [shape = 'u8[1024]{0}', space=vmem, size = 0x400, scoped, tag = 'output window, operand 0']
    %11 = vsyncpa [#allocation4], 0
    %s12 = scalar_lea.sflag [#allocation4], 1
    %13 = vsyncpa %s12, 0
    %14 = vsyncpa [#allocation6], 0
    %15 = vsyncpa [#allocation9], 0
    %16 = vsyncpa [#allocation5], 0
    %s17 = scalar_lea.sflag [#allocation5], 1
    %18 = vsyncpa %s17, 0
    loop: start=0, step=1, limit=4
    $region2: #{tpu_custom_call.1} parent=1 // loop_pre_header
      _
    $region3: #{tpu_custom_call.1} parent=1 // loop_header
      %s20 = sphi 0, %s24
      %p21 = scmp.ge.s32.totalorder %s20, 4
      %s27 = sphi 0, %s39
      %s28 = sphi 0, %s35
      %s29 = sphi 0, %s27
      %s30 = sphi 0, %s28
      %s31 = sphi 0, %s29
      %s32 = sphi 0, %s30
      %s44 = sphi 0, %s46
      %s47 = sphi 0, %s44
      %s48 = sphi 0, %s47
      %s64 = sphi 0, %s48
      %s68 = sphi 0, %s68
      %s70 = sphi 0, %s68
      %s71 = sphi 0, %s70
      %s85 = sphi 0, %s71
      %s89 = sphi 0, %s89
      %s91 = sphi 0, %s89
      %s92 = sphi 0, %s91
      %s106 = sphi 0, %s92
      %s110 = sphi 0, %s110
      %s112 = sphi 0, %s110
      %s113 = sphi 0, %s112
      %s127 = sphi 0, %s113
      %s131 = sphi 0, %s131
      %s133 = sphi 0, %s131
      %s134 = sphi 0, %s133
      %s148 = sphi 0, %s134
      %s156 = sphi 0, %s158
      %s159 = sphi 0, %s156
      %s160 = sphi 0, %s159
      %s176 = sphi 0, %s160
    $region4: #{tpu_custom_call.1} parent=1 // loop_header_branch
      %23 = sbr.rel (%p21) target = $region8
    $region5: #{tpu_custom_call.1} parent=1 // loop_body
      %s25 = ssub.s32 %s20, 1
      %s26 = ssub.s32 %s20, 2
      %s33 = sadd.s32 1, %s28
      %p34 = scmp.ge.s32.totalorder %s33, 1
      %s35 = scalar_select %p34, 0, %s33
      %s36 = sadd.s32 1, %s27
      %s37 = scalar_select %p34, %s36, %s27
      %p38 = scmp.ge.s32.totalorder %s37, 2
      %s39 = scalar_select %p38, 0, %s37
      %s40 = ssub.s32 %s27, %s39
      %s41 = ssub.s32 %s28, %s35
      %s42 = sor.u32 %s40, %s41
      %p43 = scmp.eq.s32.totalorder %s42, 0
      %s45 = sadd.s32 %s44, 1
      %s46 = scalar_select %p43, %s44, %s45
      %p49 = pneg %p43
      %p50 = scmp.eq.s32.totalorder %s20, 1
      %p51 = por %p49, %p50
      %p52 = scmp.ne.s32.totalorder %s44, %s47
      %p53 = scmp.eq.s32.totalorder %s20, 0
      %p54 = por %p52, %p53
      %p55 = scmp.ne.s32.totalorder %s44, %s47
      %p56 = scmp.eq.s32.totalorder %s25, 1
      %p57 = por %p55, %p56
      %p58 = scmp.ne.s32.totalorder %s47, %s48
      %p59 = scmp.eq.s32.totalorder %s25, 0
      %p60 = por %p58, %p59
      %p61 = scmp.ne.s32.totalorder %s47, %s48
      %p62 = scmp.eq.s32.totalorder %s26, 1
      %p63 = por %p61, %p62
      %p65 = scmp.ne.s32.totalorder %s48, %s64
      %p66 = scmp.eq.s32.totalorder %s26, 0
      %p67 = por %p65, %p66
      %s69 = sadd.s32 %s68, 1
      %p72 = scmp.eq.s32.totalorder %s20, 1
      %p73 = scmp.ne.s32.totalorder %s68, %s70
      %p74 = scmp.eq.s32.totalorder %s20, 0
      %p75 = por %p73, %p74
      %p76 = scmp.ne.s32.totalorder %s68, %s70
      %p77 = scmp.eq.s32.totalorder %s25, 1
      %p78 = por %p76, %p77
      %p79 = scmp.ne.s32.totalorder %s70, %s71
      %p80 = scmp.eq.s32.totalorder %s25, 0
      %p81 = por %p79, %p80
      %p82 = scmp.ne.s32.totalorder %s70, %s71
      %p83 = scmp.eq.s32.totalorder %s26, 1
      %p84 = por %p82, %p83
      %p86 = scmp.ne.s32.totalorder %s71, %s85
      %p87 = scmp.eq.s32.totalorder %s26, 0
      %p88 = por %p86, %p87
      %s90 = sadd.s32 %s89, 1
      %p93 = scmp.eq.s32.totalorder %s20, 1
      %p94 = scmp.ne.s32.totalorder %s89, %s91
      %p95 = scmp.eq.s32.totalorder %s20, 0
      %p96 = por %p94, %p95
      %p97 = scmp.ne.s32.totalorder %s89, %s91
      %p98 = scmp.eq.s32.totalorder %s25, 1
      %p99 = por %p97, %p98
      %p100 = scmp.ne.s32.totalorder %s91, %s92
      %p101 = scmp.eq.s32.totalorder %s25, 0
      %p102 = por %p100, %p101
      %p103 = scmp.ne.s32.totalorder %s91, %s92
      %p104 = scmp.eq.s32.totalorder %s26, 1
      %p105 = por %p103, %p104
      %p107 = scmp.ne.s32.totalorder %s92, %s106
      %p108 = scmp.eq.s32.totalorder %s26, 0
      %p109 = por %p107, %p108
      %s111 = sadd.s32 %s110, 1
      %p114 = scmp.eq.s32.totalorder %s20, 1
      %p115 = scmp.ne.s32.totalorder %s110, %s112
      %p116 = scmp.eq.s32.totalorder %s20, 0
      %p117 = por %p115, %p116
      %p118 = scmp.ne.s32.totalorder %s110, %s112
      %p119 = scmp.eq.s32.totalorder %s25, 1
      %p120 = por %p118, %p119
      %p121 = scmp.ne.s32.totalorder %s112, %s113
      %p122 = scmp.eq.s32.totalorder %s25, 0
      %p123 = por %p121, %p122
      %p124 = scmp.ne.s32.totalorder %s112, %s113
      %p125 = scmp.eq.s32.totalorder %s26, 1
      %p126 = por %p124, %p125
      %p128 = scmp.ne.s32.totalorder %s113, %s127
      %p129 = scmp.eq.s32.totalorder %s26, 0
      %p130 = por %p128, %p129
      %s132 = sadd.s32 %s131, 1
      %p135 = scmp.eq.s32.totalorder %s20, 1
      %p136 = scmp.ne.s32.totalorder %s131, %s133
      %p137 = scmp.eq.s32.totalorder %s20, 0
      %p138 = por %p136, %p137
      %p139 = scmp.ne.s32.totalorder %s131, %s133
      %p140 = scmp.eq.s32.totalorder %s25, 1
      %p141 = por %p139, %p140
      %p142 = scmp.ne.s32.totalorder %s133, %s134
      %p143 = scmp.eq.s32.totalorder %s25, 0
      %p144 = por %p142, %p143
      %p145 = scmp.ne.s32.totalorder %s133, %s134
      %p146 = scmp.eq.s32.totalorder %s26, 1
      %p147 = por %p145, %p146
      %p149 = scmp.ne.s32.totalorder %s134, %s148
      %p150 = scmp.eq.s32.totalorder %s26, 0
      %p151 = por %p149, %p150
      %s152 = ssub.s32 %s27, %s39
      %s153 = ssub.s32 %s28, %s35
      %s154 = sor.u32 %s152, %s153
      %p155 = scmp.eq.s32.totalorder %s154, 0
      %s157 = sadd.s32 %s156, 1
      %s158 = scalar_select %p155, %s156, %s157
      %p161 = pneg %p155
      %p162 = scmp.eq.s32.totalorder %s20, 1
      %p163 = por %p161, %p162
      %p164 = scmp.ne.s32.totalorder %s156, %s159
      %p165 = scmp.eq.s32.totalorder %s20, 0
      %p166 = por %p164, %p165
      %p167 = scmp.ne.s32.totalorder %s156, %s159
      %p168 = scmp.eq.s32.totalorder %s25, 1
      %p169 = por %p167, %p168
      %p170 = scmp.ne.s32.totalorder %s159, %s160
      %p171 = scmp.eq.s32.totalorder %s25, 0
      %p172 = por %p170, %p171
      %p173 = scmp.ne.s32.totalorder %s159, %s160
      %p174 = scmp.eq.s32.totalorder %s26, 1
      %p175 = por %p173, %p174
      %p177 = scmp.ne.s32.totalorder %s160, %s176
      %p178 = scmp.eq.s32.totalorder %s26, 0
      %p179 = por %p177, %p178
      %p180 = scmp.le.s32.totalorder 1, %s20
      %p181 = scmp.lt.s32.totalorder %s20, 3
      %p182 = pnand %p180, %p181
      %p183 = pneg %p182
      // Predicated region
      $region9: #{tpu_custom_call.1} parent=5 // pred_check
        _
      $region10: #{tpu_custom_call.1} parent=5 // pred_check_branch
        %185 = sbr.rel (%p182) target = $region12
      $region11: #{tpu_custom_call.1} parent=5 // pred_region
        %s186 = ssub.s32 %s20, 1
        // Predicated region
        $region13: #{tpu_custom_call.1} parent=11 // pred_check
          %p187 = pneg %p81
        $region14: #{tpu_custom_call.1} parent=11 // pred_check_branch
          %189 = sbr.rel (%p187) target = $region16
        $region15: #{tpu_custom_call.1} parent=11 // pred_region
          %s191 = ssub.s32 64, 64
          %192 = vsyncadd [#allocation6], %s191
          %s194 = sshll.u32 %s1, 4
          %s195 = int_to_ptr.vmem [resolvable:$true] %s194
          %197 = dma.vmem_to_smem %s195, 64, [#allocation7], [#allocation6]
        $region16: #{tpu_custom_call.1} parent=11 // pred_fallthru
          _
        // Predicated region
        $region17: #{tpu_custom_call.1} parent=11 // pred_check
          %p198 = pneg %p102
        $region18: #{tpu_custom_call.1} parent=11 // pred_check_branch
          %200 = sbr.rel (%p198) target = $region20
        $region19: #{tpu_custom_call.1} parent=11 // pred_region
          %s202 = ssub.s32 16, 16
          %203 = vsyncadd [#allocation9], %s202
          %s205 = sshll.u32 %s2, 4
          %s206 = int_to_ptr.vmem [resolvable:$true] %s205
          %208 = dma.vmem_to_smem %s206, 16, [#allocation8], [#allocation9]
        $region20: #{tpu_custom_call.1} parent=11 // pred_fallthru
          _
        // Predicated region
        $region21: #{tpu_custom_call.1} parent=11 // pred_check
          %p209 = pneg %p123
        $region22: #{tpu_custom_call.1} parent=11 // pred_check_branch
          %211 = sbr.rel (%p209) target = $region24
        $region23: #{tpu_custom_call.1} parent=11 // pred_region
          %s213 = ssub.s32 16, 16
          %214 = vsyncadd [#allocation9], %s213
          %s216 = sshll.u32 %s3, 4
          %s217 = int_to_ptr.vmem [resolvable:$true] %s216
          %219 = dma.vmem_to_smem %s217, 16, [#allocation10], [#allocation9]
        $region24: #{tpu_custom_call.1} parent=11 // pred_fallthru
          _
        // Predicated region
        $region25: #{tpu_custom_call.1} parent=11 // pred_check
          %p220 = pneg %p144
        $region26: #{tpu_custom_call.1} parent=11 // pred_check_branch
          %222 = sbr.rel (%p220) target = $region28
        $region27: #{tpu_custom_call.1} parent=11 // pred_region
          _
        $region28: #{tpu_custom_call.1} parent=11 // pred_fallthru
          _
      $region12: #{tpu_custom_call.1} parent=5 // pred_fallthru
        _
      %p223 = scmp.lt.s32.totalorder %s20, 2
      // Predicated region
      $region29: #{tpu_custom_call.1} parent=5 // pred_check
        %p224 = pneg %p223
      $region30: #{tpu_custom_call.1} parent=5 // pred_check_branch
        %226 = sbr.rel (%p224) target = $region32
      $region31: #{tpu_custom_call.1} parent=5 // pred_region
        // Predicated region
        $region33: #{tpu_custom_call.1} parent=31 // pred_check
          %p227 = pneg %p54
        $region34: #{tpu_custom_call.1} parent=31 // pred_check_branch
          %229 = sbr.rel (%p227) target = $region36
        $region35: #{tpu_custom_call.1} parent=31 // pred_region
          %s230 = sand.u32 %s44, 1
          %s231 = scalar_lea.sflag [#allocation4], %s230
          %s232 = sand.u32 %s44, 1
          %s233 = smul.addr %s232, 4
          %s234 = scalar_lea.vmem [#allocation3], %s233
          %s236 = ssub.s32 64, 64
          %237 = vsyncadd %s231, %s236
          %s238 = smul.addr %s27, 4
          %s239 = sadd.s32 %s28, %s238
          %s240 = smul.addr %s239, 16
          %s241 = scalar_lea.hbm %s0, %s240
          %s242 = sshll.u32 %s234, 4
          %s243 = int_to_ptr.vmem [resolvable:$true] %s242
          %248 = dma.hbm_to_vmem [thread:$0]  %s241, 64, %s243, %s231, 16, 16, 1
        $region36: #{tpu_custom_call.1} parent=31 // pred_fallthru
          _
      $region32: #{tpu_custom_call.1} parent=5 // pred_fallthru
        _
      %p249 = scmp.le.s32.totalorder 1, %s20
      %p250 = scmp.lt.s32.totalorder %s20, 3
      %p251 = pnand %p249, %p250
      %p252 = pneg %p251
      // Predicated region
      $region37: #{tpu_custom_call.1} parent=5 // pred_check
        _
      $region38: #{tpu_custom_call.1} parent=5 // pred_check_branch
        %254 = sbr.rel (%p251) target = $region40
      $region39: #{tpu_custom_call.1} parent=5 // pred_region
        %s255 = ssub.s32 %s20, 1
        %s256 = sand.u32 %s47, 1
        %s257 = scalar_lea.sflag [#allocation4], %s256
        %s258 = sand.u32 %s47, 1
        %s259 = smul.addr %s258, 4
        %s260 = scalar_lea.vmem [#allocation3], %s259
        // Predicated region
        $region41: #{tpu_custom_call.1} parent=39 // pred_check
          %p261 = pneg %p60
        $region42: #{tpu_custom_call.1} parent=39 // pred_check_branch
          %263 = sbr.rel (%p261) target = $region44
        $region43: #{tpu_custom_call.1} parent=39 // pred_region
          %264 = dma.done %s257, 64
        $region44: #{tpu_custom_call.1} parent=39 // pred_fallthru
          _
        // Predicated region
        $region45: #{tpu_custom_call.1} parent=39 // pred_check
          %p265 = pneg %p81
        $region46: #{tpu_custom_call.1} parent=39 // pred_check_branch
          %267 = sbr.rel (%p265) target = $region48
        $region47: #{tpu_custom_call.1} parent=39 // pred_region
          %268 = dma.done [#allocation6], 64
        $region48: #{tpu_custom_call.1} parent=39 // pred_fallthru
          _
        // Predicated region
        $region49: #{tpu_custom_call.1} parent=39 // pred_check
          %p269 = pneg %p102
        $region50: #{tpu_custom_call.1} parent=39 // pred_check_branch
          %271 = sbr.rel (%p269) target = $region52
        $region51: #{tpu_custom_call.1} parent=39 // pred_region
          %272 = dma.done [#allocation9], 16
        $region52: #{tpu_custom_call.1} parent=39 // pred_fallthru
          _
        // Predicated region
        $region53: #{tpu_custom_call.1} parent=39 // pred_check
          %p273 = pneg %p123
        $region54: #{tpu_custom_call.1} parent=39 // pred_check_branch
          %275 = sbr.rel (%p273) target = $region56
        $region55: #{tpu_custom_call.1} parent=39 // pred_region
          %276 = dma.done [#allocation9], 16
        $region56: #{tpu_custom_call.1} parent=39 // pred_fallthru
          _
        %277 = sfence
        %s278 = sand.u32 %s47, 1
        %s279 = scalar_lea.sflag [#allocation4], %s278
        %s280 = sand.u32 %s47, 1
        %s281 = smul.addr %s280, 4
        %s282 = scalar_lea.vmem [#allocation3], %s281
        %p283 = pneg %p60
        %p284 = pneg %p57
        %p285 = pneg %p81
        %p286 = pneg %p78
        %p287 = pneg %p102
        %p288 = pneg %p99
        %p289 = pneg %p123
        %p290 = pneg %p120
        %p291 = pneg %p144
        %p292 = pneg %p141
        %p293 = pneg %p172
        %p294 = pneg %p169
        %s295 = sand.u32 %s159, 1
        %s296 = scalar_lea.sflag [#allocation5], %s295
        %s297 = sand.u32 %s159, 1
        %s298 = scalar_lea.vmem [#allocation11], %s297
        %v299 = vld [vmem:[%s260] sm:$0x1]
        %v300 = vld [vmem:[%s260 + $0x1] sm:$0x1]
        %v301 = vld [vmem:[%s260 + $0x2] sm:$0x1]
        %v302 = vld [vmem:[%s260 + $0x3] sm:$0x1]
        %s303 = sld [smem:[#allocation2]]
        %v304 = vstv %s303
        %s305 = sld [smem:[#allocation8]]
        %v306 = vstv %s305
        %s307 = sld [smem:[#allocation7]]
        %v308 = vstv %s307
        %v309 = vmul.f32 %v308, %v299
        %v310 = vadd.f32 %v306, %v309
        %s311 = sld [smem:[#allocation7 + $0x1]]
        %v312 = vstv %s311
        %v313 = vmul.f32 %v312, %v300
        %v314 = vadd.f32 %v310, %v313
        %s315 = sld [smem:[#allocation7 + $0x2]]
        %v316 = vstv %s315
        %v317 = vmul.f32 %v316, %v301
        %v318 = vadd.f32 %v314, %v317
        %s319 = sld [smem:[#allocation7 + $0x3]]
        %v320 = vstv %s319
        %v321 = vmul.f32 %v320, %v302
        %v322 = vadd.f32 %v318, %v321
        %v323 = vmax.f32 %v322, 0.0
        %s324 = sld [smem:[#allocation10]]
        %v325 = vstv %s324
        %v326 = vmul.f32 %v325, %v323
        %v327 = vadd.f32 %v304, %v326
        %s328 = sld [smem:[#allocation8 + $0x1]]
        %v329 = vstv %s328
        %s330 = sld [smem:[#allocation7 + $0x80]]
        %v331 = vstv %s330
        %v332 = vmul.f32 %v331, %v299
        %v333 = vadd.f32 %v329, %v332
        %s334 = sld [smem:[#allocation7 + $0x81]]
        %v335 = vstv %s334
        %v336 = vmul.f32 %v335, %v300
        %v337 = vadd.f32 %v333, %v336
        %s338 = sld [smem:[#allocation7 + $0x82]]
        %v339 = vstv %s338
        %v340 = vmul.f32 %v339, %v301
        %v341 = vadd.f32 %v337, %v340
        %s342 = sld [smem:[#allocation7 + $0x83]]
        %v343 = vstv %s342
        %v344 = vmul.f32 %v343, %v302
        %v345 = vadd.f32 %v341, %v344
        %v346 = vmax.f32 %v345, 0.0
        %s347 = sld [smem:[#allocation10 + $0x1]]
        %v348 = vstv %s347
        %v349 = vmul.f32 %v348, %v346
        %v350 = vadd.f32 %v327, %v349
        %s351 = sld [smem:[#allocation8 + $0x2]]
        %v352 = vstv %s351
        %s353 = sld [smem:[#allocation7 + $0x100]]
        %v354 = vstv %s353
        %v355 = vmul.f32 %v354, %v299
        %v356 = vadd.f32 %v352, %v355
        %s357 = sld [smem:[#allocation7 + $0x101]]
        %v358 = vstv %s357
        %v359 = vmul.f32 %v358, %v300
        %v360 = vadd.f32 %v356, %v359
        %s361 = sld [smem:[#allocation7 + $0x102]]
        %v362 = vstv %s361
        %v363 = vmul.f32 %v362, %v301
        %v364 = vadd.f32 %v360, %v363
        %s365 = sld [smem:[#allocation7 + $0x103]]
        %v366 = vstv %s365
        %v367 = vmul.f32 %v366, %v302
        %v368 = vadd.f32 %v364, %v367
        %v369 = vmax.f32 %v368, 0.0
        %s370 = sld [smem:[#allocation10 + $0x2]]
        %v371 = vstv %s370
        %v372 = vmul.f32 %v371, %v369
        %v373 = vadd.f32 %v350, %v372
        %s374 = sld [smem:[#allocation8 + $0x3]]
        %v375 = vstv %s374
        %s376 = sld [smem:[#allocation7 + $0x180]]
        %v377 = vstv %s376
        %v378 = vmul.f32 %v377, %v299
        %v379 = vadd.f32 %v375, %v378
        %s380 = sld [smem:[#allocation7 + $0x181]]
        %v381 = vstv %s380
        %v382 = vmul.f32 %v381, %v300
        %v383 = vadd.f32 %v379, %v382
        %s384 = sld [smem:[#allocation7 + $0x182]]
        %v385 = vstv %s384
        %v386 = vmul.f32 %v385, %v301
        %v387 = vadd.f32 %v383, %v386
        %s388 = sld [smem:[#allocation7 + $0x183]]
        %v389 = vstv %s388
        %v390 = vmul.f32 %v389, %v302
        %v391 = vadd.f32 %v387, %v390
        %v392 = vmax.f32 %v391, 0.0
        %s393 = sld [smem:[#allocation10 + $0x3]]
        %v394 = vstv %s393
        %v395 = vmul.f32 %v394, %v392
        %v396 = vadd.f32 %v373, %v395
        %v397 = vmax.f32 %v396, -1.0
        %v398 = vmin.f32 %v397, 1.0
        %399 = vst [vmem:[%s298] sm:$0x1] %v398
        %s400 = sand.u32 %s159, 1
        %s401 = scalar_lea.sflag [#allocation5], %s400
        %s402 = sand.u32 %s159, 1
        %s403 = scalar_lea.vmem [#allocation11], %s402
        // Predicated region
        $region57: #{tpu_custom_call.1} parent=39 // pred_check
          %p404 = pneg %p169
        $region58: #{tpu_custom_call.1} parent=39 // pred_check_branch
          %406 = sbr.rel (%p404) target = $region60
        $region59: #{tpu_custom_call.1} parent=39 // pred_region
          %s408 = ssub.s32 16, 16
          %409 = vsyncadd %s401, %s408
          %s410 = sadd.s32 %s30, %s29
          %s411 = smul.addr %s410, 16
          %s412 = scalar_lea.hbm %s5, %s411
          %s414 = sshll.u32 %s403, 4
          %s415 = int_to_ptr.vmem [resolvable:$true] %s414
          %417 = dma.vmem_to_hbm [thread:$0]  %s415, 16, %s412, %s401
        $region60: #{tpu_custom_call.1} parent=39 // pred_fallthru
          _
      $region40: #{tpu_custom_call.1} parent=5 // pred_fallthru
        _
      %p418 = scmp.le.s32.totalorder 2, %s20
      // Predicated region
      $region61: #{tpu_custom_call.1} parent=5 // pred_check
        %p419 = pneg %p418
      $region62: #{tpu_custom_call.1} parent=5 // pred_check_branch
        %421 = sbr.rel (%p419) target = $region64
      $region63: #{tpu_custom_call.1} parent=5 // pred_region
        %s422 = ssub.s32 %s20, 2
        // Predicated region
        $region65: #{tpu_custom_call.1} parent=63 // pred_check
          %p423 = pneg %p175
        $region66: #{tpu_custom_call.1} parent=63 // pred_check_branch
          %425 = sbr.rel (%p423) target = $region68
        $region67: #{tpu_custom_call.1} parent=63 // pred_region
          %s426 = sand.u32 %s160, 1
          %s427 = scalar_lea.sflag [#allocation5], %s426
          %s428 = sand.u32 %s160, 1
          %s429 = scalar_lea.vmem [#allocation11], %s428
          %430 = dma.done %s427, 16
        $region68: #{tpu_custom_call.1} parent=63 // pred_fallthru
          _
      $region64: #{tpu_custom_call.1} parent=5 // pred_fallthru
        _
    $region6: #{tpu_custom_call.1} parent=1 // loop_footer
      %s24 = sadd.s32 1, %s20
    $region7: #{tpu_custom_call.1} parent=1 // loop_footer_branch
      %19 = sbr.rel target = $region3
    $region8: #{tpu_custom_call.1} parent=1 // loop_exit
      _
    %431 = vsyncpa [#allocation4], 1
    %s432 = scalar_lea.sflag [#allocation4], 1
    %433 = vsyncpa %s432, 1
    %434 = vsyncpa [#allocation5], 1
    %s435 = scalar_lea.sflag [#allocation5], 1
    %436 = vsyncpa %s435, 1
    %437 = vsyncpa [#allocation6], 1
    %s438 = scalar_lea.sflag [#allocation6], 1
    %439 = vsyncpa %s438, 1
    %440 = vsyncpa [#allocation9], 1

</llo_original>
